<compile_context>
chip_gen: v5e
topology: v5e:2x2
jax: 0.10.0
libtpu: 0.0.40
codegen_flags: <defaults>
</compile_context>

<pallas_src>
import jax
import jax.numpy as jnp
from jax.experimental import pallas as pl
from jax.experimental.pallas import tpu as pltpu


def _round_up(n, m):
    return ((n + m - 1) // m) * m


# ----------------------------------------------------------------------------
# Kernel: one (batch-tile, K-tile) step of the 3-layer MLP critic.
#   x_ref  : (TILE_B, TILE_K) f32   (cast to bf16 in-kernel for the MXU)
#   w1_ref : (TILE_K, 512)    bf16      b1_ref : (1, 512) f32
#   w2_ref : (512, 256)       bf16      b2_ref : (1, 256) f32
#   w3_ref : (256, 128)       bf16      (column 0 is the real weight, rest 0)
#   o_ref  : (TILE_B, 128)    f32       (column 0 is the real output)
#   acc_ref: (TILE_B, 512)    f32       layer-1 accumulator scratch
# ----------------------------------------------------------------------------
def _discriminator_kernel(x_ref, w1_ref, b1_ref, w2_ref, b2_ref, w3_ref,
                          o_ref, acc_ref):
    k = pl.program_id(1)
    nk = pl.num_programs(1)

    @pl.when(k == 0)
    def _init():
        acc_ref[...] = jnp.zeros_like(acc_ref)

    # Layer 1 partial product for this K tile (bf16 MXU, f32 accumulation).
    x_bf = x_ref[...].astype(jnp.bfloat16)          # VPU cast; DMA'd as f32
    acc_ref[...] += jnp.dot(x_bf, w1_ref[...],
                            preferred_element_type=jnp.float32)

    @pl.when(k == nk - 1)
    def _finalize():
        h1 = acc_ref[...] + b1_ref[...]
        h1 = jnp.where(h1 > 0, h1, 0.2 * h1)                  # LeakyReLU(0.2)

        h2 = jnp.dot(h1.astype(jnp.bfloat16), w2_ref[...],
                     preferred_element_type=jnp.float32)
        h2 = h2 + b2_ref[...]
        h2 = jnp.where(h2 > 0, h2, 0.2 * h2)                  # LeakyReLU(0.2)

        # Layer 3 against zero-padded (256, 128) w3 -> lane-dense output.
        o_ref[...] = jnp.dot(h2.astype(jnp.bfloat16), w3_ref[...],
                             preferred_element_type=jnp.float32
                             ).astype(o_ref.dtype)


def discriminator_forward(img, params, *, tile_b=512):
    """img: (B, C, H, W) float32. Returns (B, 1) float32 critic scores."""
    w1, b1, w2, b2, w3, b3 = params
    B = img.shape[0]
    x = img.reshape(B, -1).astype(jnp.float32)        # == .view(B, -1); free
    D = x.shape[1]
    H1 = w1.shape[1]
    H2 = w2.shape[1]

    # ---- batch tiling ------------------------------------------------------
    tile_b = _round_up(max(int(tile_b), 8), 8)
    if B <= 8:
        tile_b = B                                    # full-dim block (legal)
    else:
        tile_b = min(tile_b, (B // 8) * 8)            # multiple of 8, <= B
        if B >= 16:
            # >= 2 grid steps so "parallel" shards across both v7x TCs.
            tile_b = min(tile_b, _round_up(pl.cdiv(B, 2), 8))
    nb = pl.cdiv(B, tile_b)

    # ---- reduction (D) tiling ----------------------------------------------
    MAX_TILE_K = 4096          # keeps w1 / x blocks small enough for v7x VMEM
    if D <= MAX_TILE_K:
        tile_k = D
    else:
        tile_k = MAX_TILE_K
        if D % tile_k:
            # Rare fallback: zero-pad the contraction dim (zeros are inert).
            pad = tile_k - (D % tile_k)
            x = jnp.pad(x, ((0, 0), (0, pad)))
            w1 = jnp.pad(w1, ((0, pad), (0, 0)))
            D = D + pad
    nk = pl.cdiv(D, tile_k)

    # ---- operand prep (weights only; activations stay f32 in HBM) -----------
    w1_bf = w1.astype(jnp.bfloat16)
    w2_bf = w2.astype(jnp.bfloat16)
    b1r = jnp.asarray(b1, jnp.float32).reshape(1, H1)
    b2r = jnp.asarray(b2, jnp.float32).reshape(1, H2)
    # Zero-pad w3 (H2, 1) -> (H2, 128): lane-dense MXU layer 3, col 0 is real.
    w3_pad = jnp.zeros((H2, 128), jnp.bfloat16).at[:, :1].set(
        jnp.asarray(w3, jnp.float32).reshape(H2, 1).astype(jnp.bfloat16))

    flops = 2 * B * (D * H1 + H1 * H2 + H2 * 128)
    bytes_accessed = (x.size * 4 + w1_bf.size * 2 + w2_bf.size * 2
                      + w3_pad.size * 2 + (b1r.size + b2r.size) * 4
                      + B * 128 * 4)

    out = pl.pallas_call(
        _discriminator_kernel,
        out_shape=jax.ShapeDtypeStruct((B, 128), jnp.float32),
        grid=(nb, nk),
        in_specs=[
            pl.BlockSpec((tile_b, tile_k), lambda i, k: (i, k)),   # x
            pl.BlockSpec((tile_k, H1), lambda i, k: (k, 0)),       # w1
            pl.BlockSpec((1, H1), lambda i, k: (0, 0)),            # b1 resident
            pl.BlockSpec((H1, H2), lambda i, k: (0, 0)),           # w2 resident
            pl.BlockSpec((1, H2), lambda i, k: (0, 0)),            # b2 resident
            pl.BlockSpec((H2, 128), lambda i, k: (0, 0)),          # w3 resident
        ],
        out_specs=pl.BlockSpec((tile_b, 128), lambda i, k: (i, 0)),
        scratch_shapes=[pltpu.VMEM((tile_b, H1), jnp.float32)],    # layer-1 acc
        compiler_params=pltpu.CompilerParams(
            dimension_semantics=("parallel", "arbitrary"),
            vmem_limit_bytes=48 << 20,                 # headroom on v7x 64 MiB
        ),
        cost_estimate=pl.CostEstimate(
            flops=flops, transcendentals=0, bytes_accessed=bytes_accessed),
    )(x, w1_bf, b1r, w2_bf, b2r, w3_pad)

    # Column 0 of the lane-dense block is the critic score; add b3 here
    # (cheaper than a (1,1) VMEM block + in-kernel add).
    return out[:, :1] + jnp.asarray(b3, jnp.float32).reshape(1, 1)


def init_params(key, in_dim, h1=512, h2=256, out_dim=1):
    """Deterministic synthetic parameters (Kaiming-ish scaled normals)."""
    k1, k2, k3 = jax.random.split(key, 3)
    w1 = jax.random.normal(k1, (in_dim, h1), jnp.float32) * (1.0 / jnp.sqrt(in_dim))
    b1 = jnp.zeros((1, h1), jnp.float32)
    w2 = jax.random.normal(k2, (h1, h2), jnp.float32) * (1.0 / jnp.sqrt(h1))
    b2 = jnp.zeros((1, h2), jnp.float32)
    w3 = jax.random.normal(k3, (h2, out_dim), jnp.float32) * (1.0 / jnp.sqrt(h2))
    b3 = jnp.zeros((1, out_dim), jnp.float32)
    return (w1, b1, w2, b2, w3, b3)


def _reference_forward_bf16(img, params):
    """Pure-JAX reference matching the kernel's bf16-operand / f32-accum math."""
    w1, b1, w2, b2, w3, b3 = params
    x = img.reshape(img.shape[0], -1).astype(jnp.float32)
    h1 = jnp.dot(x.astype(jnp.bfloat16), w1.astype(jnp.bfloat16),
                 preferred_element_type=jnp.float32) + b1.reshape(1, -1)
    h1 = jnp.where(h1 > 0, h1, 0.2 * h1)
    h2 = jnp.dot(h1.astype(jnp.bfloat16), w2.astype(jnp.bfloat16),
                 preferred_element_type=jnp.float32) + b2.reshape(1, -1)
    h2 = jnp.where(h2 > 0, h2, 0.2 * h2)
    return (jnp.dot(h2.astype(jnp.bfloat16), w3.astype(jnp.bfloat16),
                    preferred_element_type=jnp.float32)
            + b3.reshape(1, -1))


def _reference_forward_f32(img, params):
    """Full-f32 reference (PyTorch semantics) for a loose sanity check."""
    w1, b1, w2, b2, w3, b3 = params
    x = img.reshape(img.shape[0], -1)
    h1 = x @ w1 + b1.reshape(1, -1)
    h1 = jnp.where(h1 > 0, h1, 0.2 * h1)
    h2 = h1 @ w2 + b2.reshape(1, -1)
    h2 = jnp.where(h2 > 0, h2, 0.2 * h2)
    return h2 @ w3 + b3.reshape(1, -1)


if __name__ == "__main__":
    key = jax.random.PRNGKey(0)
    k_img, k_par, k_img2 = jax.random.split(key, 3)

    # Small shapes consistent with the module: channels=1, img_size=16 -> D=256.
    B, C, H, W = 2, 1, 16, 16
    img = jax.random.normal(k_img, (B, C, H, W), jnp.float32)
    params = init_params(k_par, C * H * W)

    out = jax.block_until_ready(discriminator_forward(img, params))
    assert out.shape == (B, 1)

    # Tight check against the same bf16-operand / f32-accum math.
    ref_bf16 = _reference_forward_bf16(img, params)
    assert jnp.allclose(out, ref_bf16, atol=5e-3, rtol=5e-3)

    # Loose check against the pure-f32 PyTorch-equivalent forward.
    ref_f32 = _reference_forward_f32(img, params)
    assert jnp.allclose(out, ref_f32, atol=5e-2, rtol=5e-2)

    # Second case: multi-step grid with a ragged last batch block (no padding).
    B2 = 20
    img2 = jax.random.normal(k_img2, (B2, C, H, W), jnp.float32)
    out2 = jax.block_until_ready(discriminator_forward(img2, params))
    assert out2.shape == (B2, 1)
    assert jnp.allclose(out2, _reference_forward_bf16(img2, params),
                        atol=5e-3, rtol=5e-3)

    print("KERNEL_OK")
</pallas_src>

<mosaic_0001>
module attributes {stable_mosaic.version = 11 : i64} {
  func.func @_discriminator_kernel(%arg0: i32, %arg1: i32, %arg2: memref<2x256xf32, #tpu.memory_space<vmem>>, %arg3: memref<256x512xbf16, #tpu.memory_space<vmem>>, %arg4: memref<1x512xf32, #tpu.memory_space<vmem>>, %arg5: memref<512x256xbf16, #tpu.memory_space<vmem>>, %arg6: memref<1x256xf32, #tpu.memory_space<vmem>>, %arg7: memref<256x128xbf16, #tpu.memory_space<vmem>>, %arg8: memref<2x128xf32, #tpu.memory_space<vmem>>, %arg9: memref<2x512xf32, #tpu.memory_space<vmem>>) attributes {dimension_semantics = [#tpu.dimension_semantics<parallel>, #tpu.dimension_semantics<arbitrary>], iteration_bounds = array<i64: 1, 1>, scalar_prefetch = 0 : i64, scratch_operands = 1 : i64, tpu.core_type = #tpu.core_type<tc>, window_params = [{transform_indices = @transform_0, window_bounds = array<i64: 2, 256>}, {transform_indices = @transform_1, window_bounds = array<i64: 256, 512>}, {pipeline_mode = #tpu.pipeline_mode<synchronous>, transform_indices = @transform_2, window_bounds = array<i64: 1, 512>}, {pipeline_mode = #tpu.pipeline_mode<synchronous>, transform_indices = @transform_3, window_bounds = array<i64: 512, 256>}, {pipeline_mode = #tpu.pipeline_mode<synchronous>, transform_indices = @transform_4, window_bounds = array<i64: 1, 256>}, {pipeline_mode = #tpu.pipeline_mode<synchronous>, transform_indices = @transform_5, window_bounds = array<i64: 256, 128>}, {transform_indices = @transform_6, window_bounds = array<i64: 2, 128>}]} {
    %c0_i32 = arith.constant 0 : i32
    %0 = arith.cmpi eq, %arg1, %c0_i32 : i32
    %1 = arith.extui %0 : i1 to i32
    %c0_i32_0 = arith.constant 0 : i32
    %2 = arith.cmpi ne, %1, %c0_i32_0 : i32
    scf.if %2 {
      %cst_10 = arith.constant 0.000000e+00 : f32
      %13 = vector.broadcast %cst_10 : f32 to vector<2x512xf32>
      %c0_11 = arith.constant 0 : index
      %c0_12 = arith.constant 0 : index
      %14 = vector.load %arg9[%c0_11, %c0_12] : memref<2x512xf32, #tpu.memory_space<vmem>>, vector<2x512xf32>
      tpu.vector_store %arg9[%c0_11, %c0_12], %13 {strides = array<i32>} : memref<2x512xf32, #tpu.memory_space<vmem>>, vector<2x512xf32>,
    } else {
    }
    %c0 = arith.constant 0 : index
    %c0_1 = arith.constant 0 : index
    %3 = vector.load %arg2[%c0, %c0_1] : memref<2x256xf32, #tpu.memory_space<vmem>>, vector<2x256xf32>
    %4 = arith.truncf %3 : vector<2x256xf32> to vector<2x256xbf16>
    %c0_2 = arith.constant 0 : index
    %c0_3 = arith.constant 0 : index
    %5 = vector.load %arg9[%c0_2, %c0_3] : memref<2x512xf32, #tpu.memory_space<vmem>>, vector<2x512xf32>
    %c0_4 = arith.constant 0 : index
    %c0_5 = arith.constant 0 : index
    %6 = vector.load %arg3[%c0_4, %c0_5] : memref<256x512xbf16, #tpu.memory_space<vmem>>, vector<256x512xbf16>
    %cst = arith.constant dense<0.000000e+00> : vector<2x512xf32>
    %7 = tpu.matmul %4, %6, %cst {dimension_numbers = #tpu.dot_dimension_numbers<[1], [0], [0], [1], [0, 0, 1, 1], [], []>} : vector<2x256xbf16>, vector<256x512xbf16>, vector<2x512xf32> -> vector<2x512xf32>
    %8 = arith.addf %5, %7 : vector<2x512xf32>
    %c0_6 = arith.constant 0 : index
    %c0_7 = arith.constant 0 : index
    %9 = vector.load %arg9[%c0_6, %c0_7] : memref<2x512xf32, #tpu.memory_space<vmem>>, vector<2x512xf32>
    tpu.vector_store %arg9[%c0_6, %c0_7], %8 {strides = array<i32>} : memref<2x512xf32, #tpu.memory_space<vmem>>, vector<2x512xf32>,
    %c0_i32_8 = arith.constant 0 : i32
    %10 = arith.cmpi eq, %arg1, %c0_i32_8 : i32
    %11 = arith.extui %10 : i1 to i32
    %c0_i32_9 = arith.constant 0 : i32
    %12 = arith.cmpi ne, %11, %c0_i32_9 : i32
    scf.if %12 {
      %c0_10 = arith.constant 0 : index
      %c0_11 = arith.constant 0 : index
      %13 = vector.load %arg9[%c0_10, %c0_11] : memref<2x512xf32, #tpu.memory_space<vmem>>, vector<2x512xf32>
      %c0_12 = arith.constant 0 : index
      %c0_13 = arith.constant 0 : index
      %14 = vector.load %arg4[%c0_12, %c0_13] : memref<1x512xf32, #tpu.memory_space<vmem>>, vector<1x512xf32>
      %15 = vector.broadcast %14 : vector<1x512xf32> to vector<2x512xf32>
      %16 = arith.addf %13, %15 : vector<2x512xf32>
      %cst_14 = arith.constant 0.000000e+00 : f32
      %17 = vector.broadcast %cst_14 : f32 to vector<2x512xf32>
      %18 = arith.cmpf ogt, %16, %17 : vector<2x512xf32>
      %cst_15 = arith.constant 2.000000e-01 : f32
      %19 = vector.broadcast %cst_15 : f32 to vector<2x512xf32>
      %20 = arith.mulf %19, %16 : vector<2x512xf32>
      %21 = arith.select %18, %16, %20 : vector<2x512xi1>, vector<2x512xf32>
      %22 = arith.truncf %21 : vector<2x512xf32> to vector<2x512xbf16>
      %c0_16 = arith.constant 0 : index
      %c0_17 = arith.constant 0 : index
      %23 = vector.load %arg5[%c0_16, %c0_17] : memref<512x256xbf16, #tpu.memory_space<vmem>>, vector<512x256xbf16>
      %cst_18 = arith.constant dense<0.000000e+00> : vector<2x256xf32>
      %24 = tpu.matmul %22, %23, %cst_18 {dimension_numbers = #tpu.dot_dimension_numbers<[1], [0], [0], [1], [0, 0, 1, 1], [], []>} : vector<2x512xbf16>, vector<512x256xbf16>, vector<2x256xf32> -> vector<2x256xf32>
      %c0_19 = arith.constant 0 : index
      %c0_20 = arith.constant 0 : index
      %25 = vector.load %arg6[%c0_19, %c0_20] : memref<1x256xf32, #tpu.memory_space<vmem>>, vector<1x256xf32>
      %26 = vector.broadcast %25 : vector<1x256xf32> to vector<2x256xf32>
      %27 = arith.addf %24, %26 : vector<2x256xf32>
      %cst_21 = arith.constant 0.000000e+00 : f32
      %28 = vector.broadcast %cst_21 : f32 to vector<2x256xf32>
      %29 = arith.cmpf ogt, %27, %28 : vector<2x256xf32>
      %cst_22 = arith.constant 2.000000e-01 : f32
      %30 = vector.broadcast %cst_22 : f32 to vector<2x256xf32>
      %31 = arith.mulf %30, %27 : vector<2x256xf32>
      %32 = arith.select %29, %27, %31 : vector<2x256xi1>, vector<2x256xf32>
      %33 = arith.truncf %32 : vector<2x256xf32> to vector<2x256xbf16>
      %c0_23 = arith.constant 0 : index
      %c0_24 = arith.constant 0 : index
      %34 = vector.load %arg7[%c0_23, %c0_24] : memref<256x128xbf16, #tpu.memory_space<vmem>>, vector<256x128xbf16>
      %cst_25 = arith.constant dense<0.000000e+00> : vector<2x128xf32>
      %35 = tpu.matmul %33, %34, %cst_25 {dimension_numbers = #tpu.dot_dimension_numbers<[1], [0], [0], [1], [0, 0, 1, 1], [], []>} : vector<2x256xbf16>, vector<256x128xbf16>, vector<2x128xf32> -> vector<2x128xf32>
      %c0_26 = arith.constant 0 : index
      %c0_27 = arith.constant 0 : index
      %36 = vector.load %arg8[%c0_26, %c0_27] : memref<2x128xf32, #tpu.memory_space<vmem>>, vector<2x128xf32>
      tpu.vector_store %arg8[%c0_26, %c0_27], %35 {strides = array<i32>} : memref<2x128xf32, #tpu.memory_space<vmem>>, vector<2x128xf32>,
    } else {
    }
    return
  }
  func.func @transform_0(%arg0: i32, %arg1: i32) -> (i32, i32) {
    %c0_i32 = arith.constant 0 : i32
    return %arg0, %arg1 : i32, i32
  }
  func.func @transform_1(%arg0: i32, %arg1: i32) -> (i32, i32) {
    %c0_i32 = arith.constant 0 : i32
    %c0_i32_0 = arith.constant 0 : i32
    return %arg1, %c0_i32 : i32, i32
  }
  func.func @transform_2(%arg0: i32, %arg1: i32) -> (i32, i32) {
    %c0_i32 = arith.constant 0 : i32
    %c0_i32_0 = arith.constant 0 : i32
    %c0_i32_1 = arith.constant 0 : i32
    return %c0_i32, %c0_i32_0 : i32, i32
  }
  func.func @transform_3(%arg0: i32, %arg1: i32) -> (i32, i32) {
    %c0_i32 = arith.constant 0 : i32
    %c0_i32_0 = arith.constant 0 : i32
    %c0_i32_1 = arith.constant 0 : i32
    return %c0_i32, %c0_i32_0 : i32, i32
  }
  func.func @transform_4(%arg0: i32, %arg1: i32) -> (i32, i32) {
    %c0_i32 = arith.constant 0 : i32
    %c0_i32_0 = arith.constant 0 : i32
    %c0_i32_1 = arith.constant 0 : i32
    return %c0_i32, %c0_i32_0 : i32, i32
  }
  func.func @transform_5(%arg0: i32, %arg1: i32) -> (i32, i32) {
    %c0_i32 = arith.constant 0 : i32
    %c0_i32_0 = arith.constant 0 : i32
    %c0_i32_1 = arith.constant 0 : i32
    return %c0_i32, %c0_i32_0 : i32, i32
  }
  func.func @transform_6(%arg0: i32, %arg1: i32) -> (i32, i32) {
    %c0_i32 = arith.constant 0 : i32
    %c0_i32_0 = arith.constant 0 : i32
    return %arg0, %c0_i32 : i32, i32
  }
}

</mosaic_0001>

<llo_original>
// kernel: tpu_custom_call.1
$region0: #{tpu_custom_call.1}
  #allocation0 [shape = 'u32[]', space=smem, size = 0x4, offset = 0x4, fixed_abs, tag = 'smem constant byte address 0x4 - core index']
  #allocation1 [shape = 'u32[72,128]{1,0:T(1,128)}', space=vmem, size = 0x9000, scoped, tag = 'internal scratch']
  #allocation2 [shape = 'f32[2,512]{1,0:T(2,128)}', space=vmem, size = 0x1000, scoped, tag = 'scratch operand']
  %s0 = inlined_call_operand.hbm [shape: f32[2,256], index: 0, kind: input, shape index: {}]
  %s1 = inlined_call_operand.hbm [shape: bf16[256,512], index: 1, kind: input, shape index: {}]
  %s2 = inlined_call_operand.hbm [shape: f32[1,512], index: 2, kind: input, shape index: {}]
  %s3 = inlined_call_operand.hbm [shape: bf16[512,256], index: 3, kind: input, shape index: {}]
  %s4 = inlined_call_operand.vmem [shape: f32[1,256], index: 4, kind: input, shape index: {}]
  %s5 = inlined_call_operand.hbm [shape: bf16[256,128], index: 5, kind: input, shape index: {}]
  %s6 = inlined_call_operand.hbm [shape: f32[2,128], index: 6, kind: output, shape index: {}]
  %s7 = sld [smem:[#allocation0]]
  $region62: #{tpu_custom_call.1} parent=0
    _
  %s9 = ssub.s32 1, %s7
  %s10 = scalar_select 0, %s9, %s7
  $region1: #{tpu_custom_call.1} parent=0
    #allocation3 [shape = 'u8[2048]{0}', space=vmem, size = 0x800, scoped, tag = 'input window, operand 0, single buffered']
    #allocation4 [shape = 's32[1]{0}', space=sflag, size = 0x4, scoped, tag = 'scoped memory for tpu_custom_call.1']
    #allocation5 [shape = 's32[1]{0}', space=sflag, size = 0x4, scoped, tag = 'scoped memory for tpu_custom_call.1']
    #allocation6 [shape = 'u8[262144]{0}', space=vmem, size = 0x40000, scoped, tag = 'input window, operand 1, single buffered']
    #allocation7 [shape = 's32[1]{0}', space=sflag, size = 0x4, scoped, tag = 'scoped memory for tpu_custom_call.1']
    #allocation8 [shape = 'u8[2048]{0}', space=vmem, size = 0x800, scoped, tag = 'input window, operand 2, single buffered']
    #allocation9 [shape = 'u8[262144]{0}', space=vmem, size = 0x40000, scoped, tag = 'input window, operand 3, single buffered']
    #allocation10 [shape = 's32[1]{0}', space=sflag, size = 0x4, scoped, tag = 'scoped memory for tpu_custom_call.1']
    #allocation11 [shape = 'u8[65536]{0}', space=vmem, size = 0x10000, scoped, tag = 'input window, operand 5, single buffered']
    #allocation12 [shape = 'u8[1024]{0}', space=vmem, size = 0x400, scoped, tag = 'output window, operand 0, single buffered']
    %11 = vsyncpa [#allocation4], 0
    %12 = vsyncpa [#allocation7], 0
    %13 = vsyncpa [#allocation10], 0
    %14 = vsyncpa [#allocation5], 0
    // Predicated region
    $region2: #{tpu_custom_call.1} parent=1 // pred_check
      _
    $region3: #{tpu_custom_call.1} parent=1 // pred_check_branch
      %16 = sbr.rel (0) target = $region5
    $region4: #{tpu_custom_call.1} parent=1 // pred_region
      %18 = vsyncadd [#allocation4], 0
      %s20 = sshll.u32 %s0, 4
      %s21 = int_to_ptr.hbm [resolvable:$true] %s20
      %s22 = sshll.u32 [#allocation3], 4
      %s23 = int_to_ptr.vmem [resolvable:$true] %s22
      %25 = dma.hbm_to_vmem [thread:$0]  %s21, 64, %s23, [#allocation4]
    $region5: #{tpu_custom_call.1} parent=1 // pred_fallthru
      _
    // Predicated region
    $region6: #{tpu_custom_call.1} parent=1 // pred_check
      _
    $region7: #{tpu_custom_call.1} parent=1 // pred_check_branch
      %27 = sbr.rel (0) target = $region9
    $region8: #{tpu_custom_call.1} parent=1 // pred_region
      %29 = vsyncadd [#allocation7], 0
      %s30 = sshll.u32 %s1, 4
      %s31 = int_to_ptr.hbm [resolvable:$true] %s30
      %s32 = sshll.u32 [#allocation6], 4
      %s33 = int_to_ptr.vmem [resolvable:$true] %s32
      %38 = dma.hbm_to_vmem [thread:$0]  %s31, 8192, %s33, [#allocation7], 256, 256, 16
    $region9: #{tpu_custom_call.1} parent=1 // pred_fallthru
      _
    // Predicated region
    $region10: #{tpu_custom_call.1} parent=1 // pred_check
      _
    $region11: #{tpu_custom_call.1} parent=1 // pred_check_branch
      %40 = sbr.rel (0) target = $region13
    $region12: #{tpu_custom_call.1} parent=1 // pred_region
      %42 = vsyncadd [#allocation7], 0
      %s44 = sshll.u32 %s2, 4
      %s45 = int_to_ptr.hbm [resolvable:$true] %s44
      %s46 = sshll.u32 [#allocation8], 4
      %s47 = int_to_ptr.vmem [resolvable:$true] %s46
      %49 = dma.hbm_to_vmem [thread:$0]  %s45, 64, %s47, [#allocation7]
    $region13: #{tpu_custom_call.1} parent=1 // pred_fallthru
      _
    // Predicated region
    $region14: #{tpu_custom_call.1} parent=1 // pred_check
      _
    $region15: #{tpu_custom_call.1} parent=1 // pred_check_branch
      %51 = sbr.rel (0) target = $region17
    $region16: #{tpu_custom_call.1} parent=1 // pred_region
      %53 = vsyncadd [#allocation10], 0
      %s54 = sshll.u32 %s3, 4
      %s55 = int_to_ptr.hbm [resolvable:$true] %s54
      %s56 = sshll.u32 [#allocation9], 4
      %s57 = int_to_ptr.vmem [resolvable:$true] %s56
      %62 = dma.hbm_to_vmem [thread:$0]  %s55, 8192, %s57, [#allocation10], 128, 128, 8
    $region17: #{tpu_custom_call.1} parent=1 // pred_fallthru
      _
    // Predicated region
    $region18: #{tpu_custom_call.1} parent=1 // pred_check
      _
    $region19: #{tpu_custom_call.1} parent=1 // pred_check_branch
      %64 = sbr.rel (0) target = $region21
    $region20: #{tpu_custom_call.1} parent=1 // pred_region
      _
    $region21: #{tpu_custom_call.1} parent=1 // pred_fallthru
      _
    // Predicated region
    $region22: #{tpu_custom_call.1} parent=1 // pred_check
      _
    $region23: #{tpu_custom_call.1} parent=1 // pred_check_branch
      %66 = sbr.rel (0) target = $region25
    $region24: #{tpu_custom_call.1} parent=1 // pred_region
      %68 = vsyncadd [#allocation10], 0
      %s69 = sshll.u32 %s5, 4
      %s70 = int_to_ptr.hbm [resolvable:$true] %s69
      %s71 = sshll.u32 [#allocation11], 4
      %s72 = int_to_ptr.vmem [resolvable:$true] %s71
      %77 = dma.hbm_to_vmem [thread:$0]  %s70, 2048, %s72, [#allocation10], 64, 64, 4
    $region25: #{tpu_custom_call.1} parent=1 // pred_fallthru
      _
    // Predicated region
    $region26: #{tpu_custom_call.1} parent=1 // pred_check
      _
    $region27: #{tpu_custom_call.1} parent=1 // pred_check_branch
      %79 = sbr.rel (0) target = $region29
    $region28: #{tpu_custom_call.1} parent=1 // pred_region
      %81 = dma.done [#allocation4], 64
    $region29: #{tpu_custom_call.1} parent=1 // pred_fallthru
      _
    // Predicated region
    $region30: #{tpu_custom_call.1} parent=1 // pred_check
      _
    $region31: #{tpu_custom_call.1} parent=1 // pred_check_branch
      %83 = sbr.rel (0) target = $region33
    $region32: #{tpu_custom_call.1} parent=1 // pred_region
      %85 = dma.done [#allocation7], 8192
    $region33: #{tpu_custom_call.1} parent=1 // pred_fallthru
      _
    // Predicated region
    $region34: #{tpu_custom_call.1} parent=1 // pred_check
      _
    $region35: #{tpu_custom_call.1} parent=1 // pred_check_branch
      %87 = sbr.rel (0) target = $region37
    $region36: #{tpu_custom_call.1} parent=1 // pred_region
      %89 = dma.done [#allocation7], 64
    $region37: #{tpu_custom_call.1} parent=1 // pred_fallthru
      _
    // Predicated region
    $region38: #{tpu_custom_call.1} parent=1 // pred_check
      _
    $region39: #{tpu_custom_call.1} parent=1 // pred_check_branch
      %91 = sbr.rel (0) target = $region41
    $region40: #{tpu_custom_call.1} parent=1 // pred_region
      %93 = dma.done [#allocation10], 8192
    $region41: #{tpu_custom_call.1} parent=1 // pred_fallthru
      _
    // Predicated region
    $region42: #{tpu_custom_call.1} parent=1 // pred_check
      _
    $region43: #{tpu_custom_call.1} parent=1 // pred_check_branch
      %95 = sbr.rel (0) target = $region45
    $region44: #{tpu_custom_call.1} parent=1 // pred_region
      %97 = dma.done [#allocation10], 2048
    $region45: #{tpu_custom_call.1} parent=1 // pred_fallthru
      _
    %p98 = scmp.eq.s32.totalorder 0, 0
    // Predicated region
    $region46: #{tpu_custom_call.1} parent=1 // pred_check
      %p99 = pneg %p98
    $region47: #{tpu_custom_call.1} parent=1 // pred_check_branch
      %101 = sbr.rel (%p99) target = $region49
    $region48: #{tpu_custom_call.1} parent=1 // pred_region
      %102 = vst [vmem:[#allocation2] sm:$0xff] 0.0
    $region49: #{tpu_custom_call.1} parent=1 // pred_fallthru
      _
    %v103 = vld [vmem:[#allocation3] sm:$0xf]
    %105 = vst [vmem:[#allocation1] ss:$4 sm:$0xff] %v103
    %v106 = vld.sshfl [vmem:[#allocation1] sm:$0xff pattern:$0x73625140]
    %v107 = vld.sshfl [vmem:[#allocation1 + $0x8] sm:$0xff pattern:$0x73625140]
    %v110 = vpack.c.bf16 %v106, %v106
    %v111 = vpack.c.bf16 %v107, %v107
    %v112 = vld [vmem:[#allocation2] sm:$0xff]
    %v113 = vld [vmem:[#allocation6] sm:$0xff]
    %v114 = vld [vmem:[#allocation6 + $0x8] sm:$0xff]
    %v115 = vld [vmem:[#allocation6 + $0x10] sm:$0xff]
    %v116 = vld [vmem:[#allocation6 + $0x18] sm:$0xff]
    %v117 = vld [vmem:[#allocation6 + $0x20] sm:$0xff]
    %v118 = vld [vmem:[#allocation6 + $0x28] sm:$0xff]
    %v119 = vld [vmem:[#allocation6 + $0x30] sm:$0xff]
    %v120 = vld [vmem:[#allocation6 + $0x38] sm:$0xff]
    %v121 = vld [vmem:[#allocation6 + $0x40] sm:$0xff]
    %v122 = vld [vmem:[#allocation6 + $0x48] sm:$0xff]
    %v123 = vld [vmem:[#allocation6 + $0x50] sm:$0xff]
    %v124 = vld [vmem:[#allocation6 + $0x58] sm:$0xff]
    %v125 = vld [vmem:[#allocation6 + $0x60] sm:$0xff]
    %v126 = vld [vmem:[#allocation6 + $0x68] sm:$0xff]
    %v127 = vld [vmem:[#allocation6 + $0x70] sm:$0xff]
    %v128 = vld [vmem:[#allocation6 + $0x78] sm:$0xff]
    %v129 = vld [vmem:[#allocation6 + $0x80] sm:$0xff]
    %v130 = vld [vmem:[#allocation6 + $0x88] sm:$0xff]
    %v131 = vld [vmem:[#allocation6 + $0x90] sm:$0xff]
    %v132 = vld [vmem:[#allocation6 + $0x98] sm:$0xff]
    %v133 = vld [vmem:[#allocation6 + $0xa0] sm:$0xff]
    %v134 = vld [vmem:[#allocation6 + $0xa8] sm:$0xff]
    %v135 = vld [vmem:[#allocation6 + $0xb0] sm:$0xff]
    %v136 = vld [vmem:[#allocation6 + $0xb8] sm:$0xff]
    %v137 = vld [vmem:[#allocation6 + $0xc0] sm:$0xff]
    %v138 = vld [vmem:[#allocation6 + $0xc8] sm:$0xff]
    %v139 = vld [vmem:[#allocation6 + $0xd0] sm:$0xff]
    %v140 = vld [vmem:[#allocation6 + $0xd8] sm:$0xff]
    %v141 = vld [vmem:[#allocation6 + $0xe0] sm:$0xff]
    %v142 = vld [vmem:[#allocation6 + $0xe8] sm:$0xff]
    %v143 = vld [vmem:[#allocation6 + $0xf0] sm:$0xff]
    %v144 = vld [vmem:[#allocation6 + $0xf8] sm:$0xff]
    %v145 = vld [vmem:[#allocation6 + $0x100] sm:$0xff]
    %v146 = vld [vmem:[#allocation6 + $0x108] sm:$0xff]
    %v147 = vld [vmem:[#allocation6 + $0x110] sm:$0xff]
    %v148 = vld [vmem:[#allocation6 + $0x118] sm:$0xff]
    %v149 = vld [vmem:[#allocation6 + $0x120] sm:$0xff]
    %v150 = vld [vmem:[#allocation6 + $0x128] sm:$0xff]
    %v151 = vld [vmem:[#allocation6 + $0x130] sm:$0xff]
    %v152 = vld [vmem:[#allocation6 + $0x138] sm:$0xff]
    %v153 = vld [vmem:[#allocation6 + $0x140] sm:$0xff]
    %v154 = vld [vmem:[#allocation6 + $0x148] sm:$0xff]
    %v155 = vld [vmem:[#allocation6 + $0x150] sm:$0xff]
    %v156 = vld [vmem:[#allocation6 + $0x158] sm:$0xff]
    %v157 = vld [vmem:[#allocation6 + $0x160] sm:$0xff]
    %v158 = vld [vmem:[#allocation6 + $0x168] sm:$0xff]
    %v159 = vld [vmem:[#allocation6 + $0x170] sm:$0xff]
    %v160 = vld [vmem:[#allocation6 + $0x178] sm:$0xff]
    %v161 = vld [vmem:[#allocation6 + $0x180] sm:$0xff]
    %v162 = vld [vmem:[#allocation6 + $0x188] sm:$0xff]
    %v163 = vld [vmem:[#allocation6 + $0x190] sm:$0xff]
    %v164 = vld [vmem:[#allocation6 + $0x198] sm:$0xff]
    %v165 = vld [vmem:[#allocation6 + $0x1a0] sm:$0xff]
    %v166 = vld [vmem:[#allocation6 + $0x1a8] sm:$0xff]
    %v167 = vld [vmem:[#allocation6 + $0x1b0] sm:$0xff]
    %v168 = vld [vmem:[#allocation6 + $0x1b8] sm:$0xff]
    %v169 = vld [vmem:[#allocation6 + $0x1c0] sm:$0xff]
    %v170 = vld [vmem:[#allocation6 + $0x1c8] sm:$0xff]
    %v171 = vld [vmem:[#allocation6 + $0x1d0] sm:$0xff]
    %v172 = vld [vmem:[#allocation6 + $0x1d8] sm:$0xff]
    %v173 = vld [vmem:[#allocation6 + $0x1e0] sm:$0xff]
    %v174 = vld [vmem:[#allocation6 + $0x1e8] sm:$0xff]
    %v175 = vld [vmem:[#allocation6 + $0x1f0] sm:$0xff]
    %v176 = vld [vmem:[#allocation6 + $0x1f8] sm:$0xff]
    %v241 = vunpack.c.l.b16 %v113
    %v242 = vunpack.c.h.b16 %v113
    %v243 = vunpack.c.l.b16 %v114
    %v244 = vunpack.c.h.b16 %v114
    %v245 = vunpack.c.l.b16 %v115
    %v246 = vunpack.c.h.b16 %v115
    %v247 = vunpack.c.l.b16 %v116
    %v248 = vunpack.c.h.b16 %v116
    %v249 = vunpack.c.l.b16 %v117
    %v250 = vunpack.c.h.b16 %v117
    %v251 = vunpack.c.l.b16 %v118
    %v252 = vunpack.c.h.b16 %v118
    %v253 = vunpack.c.l.b16 %v119
    %v254 = vunpack.c.h.b16 %v119
    %v255 = vunpack.c.l.b16 %v120
    %v256 = vunpack.c.h.b16 %v120
    %v257 = vunpack.c.l.b16 %v121
    %v258 = vunpack.c.h.b16 %v121
    %v259 = vunpack.c.l.b16 %v122
    %v260 = vunpack.c.h.b16 %v122
    %v261 = vunpack.c.l.b16 %v123
    %v262 = vunpack.c.h.b16 %v123
    %v263 = vunpack.c.l.b16 %v124
    %v264 = vunpack.c.h.b16 %v124
    %v265 = vunpack.c.l.b16 %v125
    %v266 = vunpack.c.h.b16 %v125
    %v267 = vunpack.c.l.b16 %v126
    %v268 = vunpack.c.h.b16 %v126
    %v269 = vunpack.c.l.b16 %v127
    %v270 = vunpack.c.h.b16 %v127
    %v271 = vunpack.c.l.b16 %v128
    %v272 = vunpack.c.h.b16 %v128
    %v273 = vunpack.c.l.b16 %v129
    %v274 = vunpack.c.h.b16 %v129
    %v275 = vunpack.c.l.b16 %v130
    %v276 = vunpack.c.h.b16 %v130
    %v277 = vunpack.c.l.b16 %v131
    %v278 = vunpack.c.h.b16 %v131
    %v279 = vunpack.c.l.b16 %v132
    %v280 = vunpack.c.h.b16 %v132
    %v281 = vunpack.c.l.b16 %v133
    %v282 = vunpack.c.h.b16 %v133
    %v283 = vunpack.c.l.b16 %v134
    %v284 = vunpack.c.h.b16 %v134
    %v285 = vunpack.c.l.b16 %v135
    %v286 = vunpack.c.h.b16 %v135
    %v287 = vunpack.c.l.b16 %v136
    %v288 = vunpack.c.h.b16 %v136
    %v289 = vunpack.c.l.b16 %v137
    %v290 = vunpack.c.h.b16 %v137
    %v291 = vunpack.c.l.b16 %v138
    %v292 = vunpack.c.h.b16 %v138
    %v293 = vunpack.c.l.b16 %v139
    %v294 = vunpack.c.h.b16 %v139
    %v295 = vunpack.c.l.b16 %v140
    %v296 = vunpack.c.h.b16 %v140
    %v297 = vunpack.c.l.b16 %v141
    %v298 = vunpack.c.h.b16 %v141
    %v299 = vunpack.c.l.b16 %v142
    %v300 = vunpack.c.h.b16 %v142
    %v301 = vunpack.c.l.b16 %v143
    %v302 = vunpack.c.h.b16 %v143
    %v303 = vunpack.c.l.b16 %v144
    %v304 = vunpack.c.h.b16 %v144
    %v305 = vunpack.c.l.b16 %v145
    %v306 = vunpack.c.h.b16 %v145
    %v307 = vunpack.c.l.b16 %v146
    %v308 = vunpack.c.h.b16 %v146
    %v309 = vunpack.c.l.b16 %v147
    %v310 = vunpack.c.h.b16 %v147
    %v311 = vunpack.c.l.b16 %v148
    %v312 = vunpack.c.h.b16 %v148
    %v313 = vunpack.c.l.b16 %v149
    %v314 = vunpack.c.h.b16 %v149
    %v315 = vunpack.c.l.b16 %v150
    %v316 = vunpack.c.h.b16 %v150
    %v317 = vunpack.c.l.b16 %v151
    %v318 = vunpack.c.h.b16 %v151
    %v319 = vunpack.c.l.b16 %v152
    %v320 = vunpack.c.h.b16 %v152
    %v321 = vunpack.c.l.b16 %v153
    %v322 = vunpack.c.h.b16 %v153
    %v323 = vunpack.c.l.b16 %v154
    %v324 = vunpack.c.h.b16 %v154
    %v325 = vunpack.c.l.b16 %v155
    %v326 = vunpack.c.h.b16 %v155
    %v327 = vunpack.c.l.b16 %v156
    %v328 = vunpack.c.h.b16 %v156
    %v329 = vunpack.c.l.b16 %v157
    %v330 = vunpack.c.h.b16 %v157
    %v331 = vunpack.c.l.b16 %v158
    %v332 = vunpack.c.h.b16 %v158
    %v333 = vunpack.c.l.b16 %v159
    %v334 = vunpack.c.h.b16 %v159
    %v335 = vunpack.c.l.b16 %v160
    %v336 = vunpack.c.h.b16 %v160
    %v337 = vunpack.c.l.b16 %v161
    %v338 = vunpack.c.h.b16 %v161
    %v339 = vunpack.c.l.b16 %v162
    %v340 = vunpack.c.h.b16 %v162
    %v341 = vunpack.c.l.b16 %v163
    %v342 = vunpack.c.h.b16 %v163
    %v343 = vunpack.c.l.b16 %v164
    %v344 = vunpack.c.h.b16 %v164
    %v345 = vunpack.c.l.b16 %v165
    %v346 = vunpack.c.h.b16 %v165
    %v347 = vunpack.c.l.b16 %v166
    %v348 = vunpack.c.h.b16 %v166
    %v349 = vunpack.c.l.b16 %v167
    %v350 = vunpack.c.h.b16 %v167
    %v351 = vunpack.c.l.b16 %v168
    %v352 = vunpack.c.h.b16 %v168
    %v353 = vunpack.c.l.b16 %v169
    %v354 = vunpack.c.h.b16 %v169
    %v355 = vunpack.c.l.b16 %v170
    %v356 = vunpack.c.h.b16 %v170
    %v357 = vunpack.c.l.b16 %v171
    %v358 = vunpack.c.h.b16 %v171
    %v359 = vunpack.c.l.b16 %v172
    %v360 = vunpack.c.h.b16 %v172
    %v361 = vunpack.c.l.b16 %v173
    %v362 = vunpack.c.h.b16 %v173
    %v363 = vunpack.c.l.b16 %v174
    %v364 = vunpack.c.h.b16 %v174
    %v365 = vunpack.c.l.b16 %v175
    %v366 = vunpack.c.h.b16 %v175
    %v367 = vunpack.c.l.b16 %v176
    %v368 = vunpack.c.h.b16 %v176
    %v369 = vpack.c.b16 %v245, %v241
    %v370 = vpack.c.b16 %v246, %v242
    %v371 = vpack.c.b16 %v247, %v243
    %v372 = vpack.c.b16 %v248, %v244
    %v373 = vpack.c.b16 %v253, %v249
    %v374 = vpack.c.b16 %v254, %v250
    %v375 = vpack.c.b16 %v255, %v251
    %v376 = vpack.c.b16 %v256, %v252
    %v377 = vpack.c.b16 %v261, %v257
    %v378 = vpack.c.b16 %v262, %v258
    %v379 = vpack.c.b16 %v263, %v259
    %v380 = vpack.c.b16 %v264, %v260
    %v381 = vpack.c.b16 %v269, %v265
    %v382 = vpack.c.b16 %v270, %v266
    %v383 = vpack.c.b16 %v271, %v267
    %v384 = vpack.c.b16 %v272, %v268
    %v385 = vpack.c.b16 %v277, %v273
    %v386 = vpack.c.b16 %v278, %v274
    %v387 = vpack.c.b16 %v279, %v275
    %v388 = vpack.c.b16 %v280, %v276
    %v389 = vpack.c.b16 %v285, %v281
    %v390 = vpack.c.b16 %v286, %v282
    %v391 = vpack.c.b16 %v287, %v283
    %v392 = vpack.c.b16 %v288, %v284
    %v393 = vpack.c.b16 %v293, %v289
    %v394 = vpack.c.b16 %v294, %v290
    %v395 = vpack.c.b16 %v295, %v291
    %v396 = vpack.c.b16 %v296, %v292
    %v397 = vpack.c.b16 %v301, %v297
    %v398 = vpack.c.b16 %v302, %v298
    %v399 = vpack.c.b16 %v303, %v299
    %v400 = vpack.c.b16 %v304, %v300
    %v401 = vpack.c.b16 %v309, %v305
    %v402 = vpack.c.b16 %v310, %v306
    %v403 = vpack.c.b16 %v311, %v307
    %v404 = vpack.c.b16 %v312, %v308
    %v405 = vpack.c.b16 %v317, %v313
    %v406 = vpack.c.b16 %v318, %v314
    %v407 = vpack.c.b16 %v319, %v315
    %v408 = vpack.c.b16 %v320, %v316
    %v409 = vpack.c.b16 %v325, %v321
    %v410 = vpack.c.b16 %v326, %v322
    %v411 = vpack.c.b16 %v327, %v323
    %v412 = vpack.c.b16 %v328, %v324
    %v413 = vpack.c.b16 %v333, %v329
    %v414 = vpack.c.b16 %v334, %v330
    %v415 = vpack.c.b16 %v335, %v331
    %v416 = vpack.c.b16 %v336, %v332
    %v417 = vpack.c.b16 %v341, %v337
    %v418 = vpack.c.b16 %v342, %v338
    %v419 = vpack.c.b16 %v343, %v339
    %v420 = vpack.c.b16 %v344, %v340
    %v421 = vpack.c.b16 %v349, %v345
    %v422 = vpack.c.b16 %v350, %v346
    %v423 = vpack.c.b16 %v351, %v347
    %v424 = vpack.c.b16 %v352, %v348
    %v425 = vpack.c.b16 %v357, %v353
    %v426 = vpack.c.b16 %v358, %v354
    %v427 = vpack.c.b16 %v359, %v355
    %v428 = vpack.c.b16 %v360, %v356
    %v429 = vpack.c.b16 %v365, %v361
    %v430 = vpack.c.b16 %v366, %v362
    %v431 = vpack.c.b16 %v367, %v363
    %v432 = vpack.c.b16 %v368, %v364
    %497 = vmatpush.bf16.msra.mxu0 %v397
    %498 = vmatpush.bf16.msra.mxu0 %v393
    %499 = vmatpush.bf16.msra.mxu0 %v389
    %500 = vmatpush.bf16.msra.mxu0 %v385
    %501 = vmatpush.bf16.msra.mxu0 %v381
    %502 = vmatpush.bf16.msra.mxu0 %v377
    %503 = vmatpush.bf16.msra.mxu0 %v373
    %504 = vmatpush.bf16.msra.mxu0 %v369
    %505 = vmatmul.bf16.gmra.mxu0 %v110
    %v506 = vpop.f32.mrf.mxu0
    %v507 = vadd.f32 0.0, %v506
    %v508 = vpop.f32.mrf.mxu0
    %509 = vdwg.mxu0
    %510 = vmatpush.bf16.msra.mxu0 %v429
    %511 = vmatpush.bf16.msra.mxu0 %v425
    %512 = vmatpush.bf16.msra.mxu0 %v421
    %513 = vmatpush.bf16.msra.mxu0 %v417
    %514 = vmatpush.bf16.msra.mxu0 %v413
    %515 = vmatpush.bf16.msra.mxu0 %v409
    %516 = vmatpush.bf16.msra.mxu0 %v405
    %517 = vmatpush.bf16.msra.mxu0 %v401
    %518 = vmatmul.bf16.gmra.mxu0 %v111
    %v519 = vpop.f32.mrf.mxu0
    %v520 = vadd.f32 %v507, %v519
    %v521 = vpop.f32.mrf.mxu0
    %522 = vdwg.mxu0
    %523 = vmatpush.bf16.msra.mxu0 %v398
    %524 = vmatpush.bf16.msra.mxu0 %v394
    %525 = vmatpush.bf16.msra.mxu0 %v390
    %526 = vmatpush.bf16.msra.mxu0 %v386
    %527 = vmatpush.bf16.msra.mxu0 %v382
    %528 = vmatpush.bf16.msra.mxu0 %v378
    %529 = vmatpush.bf16.msra.mxu0 %v374
    %530 = vmatpush.bf16.msra.mxu0 %v370
    %531 = vmatmul.bf16.gmra.mxu0 %v110
    %v532 = vpop.f32.mrf.mxu0
    %v533 = vadd.f32 0.0, %v532
    %v534 = vpop.f32.mrf.mxu0
    %535 = vdwg.mxu0
    %536 = vmatpush.bf16.msra.mxu0 %v430
    %537 = vmatpush.bf16.msra.mxu0 %v426
    %538 = vmatpush.bf16.msra.mxu0 %v422
    %539 = vmatpush.bf16.msra.mxu0 %v418
    %540 = vmatpush.bf16.msra.mxu0 %v414
    %541 = vmatpush.bf16.msra.mxu0 %v410
    %542 = vmatpush.bf16.msra.mxu0 %v406
    %543 = vmatpush.bf16.msra.mxu0 %v402
    %544 = vmatmul.bf16.gmra.mxu0 %v111
    %v545 = vpop.f32.mrf.mxu0
    %v546 = vadd.f32 %v533, %v545
    %v547 = vpop.f32.mrf.mxu0
    %548 = vdwg.mxu0
    %549 = vmatpush.bf16.msra.mxu0 %v399
    %550 = vmatpush.bf16.msra.mxu0 %v395
    %551 = vmatpush.bf16.msra.mxu0 %v391
    %552 = vmatpush.bf16.msra.mxu0 %v387
    %553 = vmatpush.bf16.msra.mxu0 %v383
    %554 = vmatpush.bf16.msra.mxu0 %v379
    %555 = vmatpush.bf16.msra.mxu0 %v375
    %556 = vmatpush.bf16.msra.mxu0 %v371
    %557 = vmatmul.bf16.gmra.mxu0 %v110
    %v558 = vpop.f32.mrf.mxu0
    %v559 = vadd.f32 0.0, %v558
    %v560 = vpop.f32.mrf.mxu0
    %561 = vdwg.mxu0
    %562 = vmatpush.bf16.msra.mxu0 %v431
    %563 = vmatpush.bf16.msra.mxu0 %v427
    %564 = vmatpush.bf16.msra.mxu0 %v423
    %565 = vmatpush.bf16.msra.mxu0 %v419
    %566 = vmatpush.bf16.msra.mxu0 %v415
    %567 = vmatpush.bf16.msra.mxu0 %v411
    %568 = vmatpush.bf16.msra.mxu0 %v407
    %569 = vmatpush.bf16.msra.mxu0 %v403
    %570 = vmatmul.bf16.gmra.mxu0 %v111
    %v571 = vpop.f32.mrf.mxu0
    %v572 = vadd.f32 %v559, %v571
    %v573 = vpop.f32.mrf.mxu0
    %574 = vdwg.mxu0
    %575 = vmatpush.bf16.msra.mxu0 %v400
    %576 = vmatpush.bf16.msra.mxu0 %v396
    %577 = vmatpush.bf16.msra.mxu0 %v392
    %578 = vmatpush.bf16.msra.mxu0 %v388
    %579 = vmatpush.bf16.msra.mxu0 %v384
    %580 = vmatpush.bf16.msra.mxu0 %v380
    %581 = vmatpush.bf16.msra.mxu0 %v376
    %582 = vmatpush.bf16.msra.mxu0 %v372
    %583 = vmatmul.bf16.gmra.mxu0 %v110
    %v584 = vpop.f32.mrf.mxu0
    %v585 = vadd.f32 0.0, %v584
    %v586 = vpop.f32.mrf.mxu0
    %587 = vdwg.mxu0
    %588 = vmatpush.bf16.msra.mxu0 %v432
    %589 = vmatpush.bf16.msra.mxu0 %v428
    %590 = vmatpush.bf16.msra.mxu0 %v424
    %591 = vmatpush.bf16.msra.mxu0 %v420
    %592 = vmatpush.bf16.msra.mxu0 %v416
    %593 = vmatpush.bf16.msra.mxu0 %v412
    %594 = vmatpush.bf16.msra.mxu0 %v408
    %595 = vmatpush.bf16.msra.mxu0 %v404
    %596 = vmatmul.bf16.gmra.mxu0 %v111
    %v597 = vpop.f32.mrf.mxu0
    %v598 = vadd.f32 %v585, %v597
    %v599 = vpop.f32.mrf.mxu0
    %600 = vdwg.mxu0
    %v605 = vrot.slane %v546, 6
    %v606 = vrot.slane %v572, 4
    %v607 = vrot.slane %v598, 2
    %vm608 = vcmask 1041408
    %v609 = vsel %vm608, %v520, %v605
    %vm610 = vcmask 1045508
    %v611 = vsel %vm610, %v606, %v607
    %vm612 = vcmask 1043456
    %v613 = vsel %vm612, %v609, %v611
    %v615 = vadd.f32 %v112, %v613
    %616 = vst [vmem:[#allocation2] sm:$0xff] %v615
    // Predicated region
    $region50: #{tpu_custom_call.1} parent=1 // pred_check
      %p617 = pneg %p98
    $region51: #{tpu_custom_call.1} parent=1 // pred_check_branch
      %619 = sbr.rel (%p617) target = $region53
    $region52: #{tpu_custom_call.1} parent=1 // pred_region
      %v620 = vld [vmem:[#allocation2] sm:$0xff]
      %v621 = vld [vmem:[#allocation8] sm:$0xf]
      %v623 = vperm.slane %v621, 0
      %v624 = vperm.slane %v621, 1
      %v625 = vperm.slane %v621, 2
      %v626 = vperm.slane %v621, 3
      %v627 = vrot.slane %v624, 6
      %v628 = vrot.slane %v625, 4
      %v629 = vrot.slane %v626, 2
      %v630 = vsel %vm608, %v623, %v627
      %v631 = vsel %vm610, %v628, %v629
      %v632 = vsel %vm612, %v630, %v631
      %v634 = vadd.f32 %v620, %v632
      %vm635 = vcmp.gt.f32.partialorder %v634, 0.0
      %v636 = vmul.f32 %v634, 0.2
      %v637 = vsel %vm635, %v634, %v636
      %639 = vst [vmem:[#allocation1] ss:$4 sm:$0xff] %v637
      %v640 = vld.sshfl [vmem:[#allocation1] sm:$0xff pattern:$0x73625140]
      %v641 = vld.sshfl [vmem:[#allocation1 + $0x8] sm:$0xff pattern:$0x73625140]
      %v642 = vld.sshfl [vmem:[#allocation1 + $0x10] sm:$0xff pattern:$0x73625140]
      %v643 = vld.sshfl [vmem:[#allocation1 + $0x18] sm:$0xff pattern:$0x73625140]
      %v648 = vpack.c.bf16 %v640, %v640
      %v649 = vpack.c.bf16 %v641, %v641
      %v650 = vpack.c.bf16 %v642, %v642
      %v651 = vpack.c.bf16 %v643, %v643
      %v652 = vld [vmem:[#allocation9] sm:$0xff]
      %v653 = vld [vmem:[#allocation9 + $0x8] sm:$0xff]
      %v654 = vld [vmem:[#allocation9 + $0x10] sm:$0xff]
      %v655 = vld [vmem:[#allocation9 + $0x18] sm:$0xff]
      %v656 = vld [vmem:[#allocation9 + $0x20] sm:$0xff]
      %v657 = vld [vmem:[#allocation9 + $0x28] sm:$0xff]
      %v658 = vld [vmem:[#allocation9 + $0x30] sm:$0xff]
      %v659 = vld [vmem:[#allocation9 + $0x38] sm:$0xff]
      %v660 = vld [vmem:[#allocation9 + $0x40] sm:$0xff]
      %v661 = vld [vmem:[#allocation9 + $0x48] sm:$0xff]
      %v662 = vld [vmem:[#allocation9 + $0x50] sm:$0xff]
      %v663 = vld [vmem:[#allocation9 + $0x58] sm:$0xff]
      %v664 = vld [vmem:[#allocation9 + $0x60] sm:$0xff]
      %v665 = vld [vmem:[#allocation9 + $0x68] sm:$0xff]
      %v666 = vld [vmem:[#allocation9 + $0x70] sm:$0xff]
      %v667 = vld [vmem:[#allocation9 + $0x78] sm:$0xff]
      %v668 = vld [vmem:[#allocation9 + $0x80] sm:$0xff]
      %v669 = vld [vmem:[#allocation9 + $0x88] sm:$0xff]
      %v670 = vld [vmem:[#allocation9 + $0x90] sm:$0xff]
      %v671 = vld [vmem:[#allocation9 + $0x98] sm:$0xff]
      %v672 = vld [vmem:[#allocation9 + $0xa0] sm:$0xff]
      %v673 = vld [vmem:[#allocation9 + $0xa8] sm:$0xff]
      %v674 = vld [vmem:[#allocation9 + $0xb0] sm:$0xff]
      %v675 = vld [vmem:[#allocation9 + $0xb8] sm:$0xff]
      %v676 = vld [vmem:[#allocation9 + $0xc0] sm:$0xff]
      %v677 = vld [vmem:[#allocation9 + $0xc8] sm:$0xff]
      %v678 = vld [vmem:[#allocation9 + $0xd0] sm:$0xff]
      %v679 = vld [vmem:[#allocation9 + $0xd8] sm:$0xff]
      %v680 = vld [vmem:[#allocation9 + $0xe0] sm:$0xff]
      %v681 = vld [vmem:[#allocation9 + $0xe8] sm:$0xff]
      %v682 = vld [vmem:[#allocation9 + $0xf0] sm:$0xff]
      %v683 = vld [vmem:[#allocation9 + $0xf8] sm:$0xff]
      %v684 = vld [vmem:[#allocation9 + $0x100] sm:$0xff]
      %v685 = vld [vmem:[#allocation9 + $0x108] sm:$0xff]
      %v686 = vld [vmem:[#allocation9 + $0x110] sm:$0xff]
      %v687 = vld [vmem:[#allocation9 + $0x118] sm:$0xff]
      %v688 = vld [vmem:[#allocation9 + $0x120] sm:$0xff]
      %v689 = vld [vmem:[#allocation9 + $0x128] sm:$0xff]
      %v690 = vld [vmem:[#allocation9 + $0x130] sm:$0xff]
      %v691 = vld [vmem:[#allocation9 + $0x138] sm:$0xff]
      %v692 = vld [vmem:[#allocation9 + $0x140] sm:$0xff]
      %v693 = vld [vmem:[#allocation9 + $0x148] sm:$0xff]
      %v694 = vld [vmem:[#allocation9 + $0x150] sm:$0xff]
      %v695 = vld [vmem:[#allocation9 + $0x158] sm:$0xff]
      %v696 = vld [vmem:[#allocation9 + $0x160] sm:$0xff]
      %v697 = vld [vmem:[#allocation9 + $0x168] sm:$0xff]
      %v698 = vld [vmem:[#allocation9 + $0x170] sm:$0xff]
      %v699 = vld [vmem:[#allocation9 + $0x178] sm:$0xff]
      %v700 = vld [vmem:[#allocation9 + $0x180] sm:$0xff]
      %v701 = vld [vmem:[#allocation9 + $0x188] sm:$0xff]
      %v702 = vld [vmem:[#allocation9 + $0x190] sm:$0xff]
      %v703 = vld [vmem:[#allocation9 + $0x198] sm:$0xff]
      %v704 = vld [vmem:[#allocation9 + $0x1a0] sm:$0xff]
      %v705 = vld [vmem:[#allocation9 + $0x1a8] sm:$0xff]
      %v706 = vld [vmem:[#allocation9 + $0x1b0] sm:$0xff]
      %v707 = vld [vmem:[#allocation9 + $0x1b8] sm:$0xff]
      %v708 = vld [vmem:[#allocation9 + $0x1c0] sm:$0xff]
      %v709 = vld [vmem:[#allocation9 + $0x1c8] sm:$0xff]
      %v710 = vld [vmem:[#allocation9 + $0x1d0] sm:$0xff]
      %v711 = vld [vmem:[#allocation9 + $0x1d8] sm:$0xff]
      %v712 = vld [vmem:[#allocation9 + $0x1e0] sm:$0xff]
      %v713 = vld [vmem:[#allocation9 + $0x1e8] sm:$0xff]
      %v714 = vld [vmem:[#allocation9 + $0x1f0] sm:$0xff]
      %v715 = vld [vmem:[#allocation9 + $0x1f8] sm:$0xff]
      %v716 = vld [vmem:[%s4] sm:$0x3]
      %v718 = vperm.slane %v716, 0
      %v719 = vperm.slane %v716, 1
      %v786 = vunpack.c.l.b16 %v652
      %v787 = vunpack.c.h.b16 %v652
      %v788 = vunpack.c.l.b16 %v653
      %v789 = vunpack.c.h.b16 %v653
      %v790 = vunpack.c.l.b16 %v654
      %v791 = vunpack.c.h.b16 %v654
      %v792 = vunpack.c.l.b16 %v655
      %v793 = vunpack.c.h.b16 %v655
      %v794 = vunpack.c.l.b16 %v656
      %v795 = vunpack.c.h.b16 %v656
      %v796 = vunpack.c.l.b16 %v657
      %v797 = vunpack.c.h.b16 %v657
      %v798 = vunpack.c.l.b16 %v658
      %v799 = vunpack.c.h.b16 %v658
      %v800 = vunpack.c.l.b16 %v659
      %v801 = vunpack.c.h.b16 %v659
      %v802 = vunpack.c.l.b16 %v660
      %v803 = vunpack.c.h.b16 %v660
      %v804 = vunpack.c.l.b16 %v661
      %v805 = vunpack.c.h.b16 %v661
      %v806 = vunpack.c.l.b16 %v662
      %v807 = vunpack.c.h.b16 %v662
      %v808 = vunpack.c.l.b16 %v663
      %v809 = vunpack.c.h.b16 %v663
      %v810 = vunpack.c.l.b16 %v664
      %v811 = vunpack.c.h.b16 %v664
      %v812 = vunpack.c.l.b16 %v665
      %v813 = vunpack.c.h.b16 %v665
      %v814 = vunpack.c.l.b16 %v666
      %v815 = vunpack.c.h.b16 %v666
      %v816 = vunpack.c.l.b16 %v667
      %v817 = vunpack.c.h.b16 %v667
      %v818 = vunpack.c.l.b16 %v668
      %v819 = vunpack.c.h.b16 %v668
      %v820 = vunpack.c.l.b16 %v669
      %v821 = vunpack.c.h.b16 %v669
      %v822 = vunpack.c.l.b16 %v670
      %v823 = vunpack.c.h.b16 %v670
      %v824 = vunpack.c.l.b16 %v671
      %v825 = vunpack.c.h.b16 %v671
      %v826 = vunpack.c.l.b16 %v672
      %v827 = vunpack.c.h.b16 %v672
      %v828 = vunpack.c.l.b16 %v673
      %v829 = vunpack.c.h.b16 %v673
      %v830 = vunpack.c.l.b16 %v674
      %v831 = vunpack.c.h.b16 %v674
      %v832 = vunpack.c.l.b16 %v675
      %v833 = vunpack.c.h.b16 %v675
      %v834 = vunpack.c.l.b16 %v676
      %v835 = vunpack.c.h.b16 %v676
      %v836 = vunpack.c.l.b16 %v677
      %v837 = vunpack.c.h.b16 %v677
      %v838 = vunpack.c.l.b16 %v678
      %v839 = vunpack.c.h.b16 %v678
      %v840 = vunpack.c.l.b16 %v679
      %v841 = vunpack.c.h.b16 %v679
      %v842 = vunpack.c.l.b16 %v680
      %v843 = vunpack.c.h.b16 %v680
      %v844 = vunpack.c.l.b16 %v681
      %v845 = vunpack.c.h.b16 %v681
      %v846 = vunpack.c.l.b16 %v682
      %v847 = vunpack.c.h.b16 %v682
      %v848 = vunpack.c.l.b16 %v683
      %v849 = vunpack.c.h.b16 %v683
      %v850 = vunpack.c.l.b16 %v684
      %v851 = vunpack.c.h.b16 %v684
      %v852 = vunpack.c.l.b16 %v685
      %v853 = vunpack.c.h.b16 %v685
      %v854 = vunpack.c.l.b16 %v686
      %v855 = vunpack.c.h.b16 %v686
      %v856 = vunpack.c.l.b16 %v687
      %v857 = vunpack.c.h.b16 %v687
      %v858 = vunpack.c.l.b16 %v688
      %v859 = vunpack.c.h.b16 %v688
      %v860 = vunpack.c.l.b16 %v689
      %v861 = vunpack.c.h.b16 %v689
      %v862 = vunpack.c.l.b16 %v690
      %v863 = vunpack.c.h.b16 %v690
      %v864 = vunpack.c.l.b16 %v691
      %v865 = vunpack.c.h.b16 %v691
      %v866 = vunpack.c.l.b16 %v692
      %v867 = vunpack.c.h.b16 %v692
      %v868 = vunpack.c.l.b16 %v693
      %v869 = vunpack.c.h.b16 %v693
      %v870 = vunpack.c.l.b16 %v694
      %v871 = vunpack.c.h.b16 %v694
      %v872 = vunpack.c.l.b16 %v695
      %v873 = vunpack.c.h.b16 %v695
      %v874 = vunpack.c.l.b16 %v696
      %v875 = vunpack.c.h.b16 %v696
      %v876 = vunpack.c.l.b16 %v697
      %v877 = vunpack.c.h.b16 %v697
      %v878 = vunpack.c.l.b16 %v698
      %v879 = vunpack.c.h.b16 %v698
      %v880 = vunpack.c.l.b16 %v699
      %v881 = vunpack.c.h.b16 %v699
      %v882 = vunpack.c.l.b16 %v700
      %v883 = vunpack.c.h.b16 %v700
      %v884 = vunpack.c.l.b16 %v701
      %v885 = vunpack.c.h.b16 %v701
      %v886 = vunpack.c.l.b16 %v702
      %v887 = vunpack.c.h.b16 %v702
      %v888 = vunpack.c.l.b16 %v703
      %v889 = vunpack.c.h.b16 %v703
      %v890 = vunpack.c.l.b16 %v704
      %v891 = vunpack.c.h.b16 %v704
      %v892 = vunpack.c.l.b16 %v705
      %v893 = vunpack.c.h.b16 %v705
      %v894 = vunpack.c.l.b16 %v706
      %v895 = vunpack.c.h.b16 %v706
      %v896 = vunpack.c.l.b16 %v707
      %v897 = vunpack.c.h.b16 %v707
      %v898 = vunpack.c.l.b16 %v708
      %v899 = vunpack.c.h.b16 %v708
      %v900 = vunpack.c.l.b16 %v709
      %v901 = vunpack.c.h.b16 %v709
      %v902 = vunpack.c.l.b16 %v710
      %v903 = vunpack.c.h.b16 %v710
      %v904 = vunpack.c.l.b16 %v711
      %v905 = vunpack.c.h.b16 %v711
      %v906 = vunpack.c.l.b16 %v712
      %v907 = vunpack.c.h.b16 %v712
      %v908 = vunpack.c.l.b16 %v713
      %v909 = vunpack.c.h.b16 %v713
      %v910 = vunpack.c.l.b16 %v714
      %v911 = vunpack.c.h.b16 %v714
      %v912 = vunpack.c.l.b16 %v715
      %v913 = vunpack.c.h.b16 %v715
      %v914 = vpack.c.b16 %v788, %v786
      %v915 = vpack.c.b16 %v789, %v787
      %v916 = vpack.c.b16 %v792, %v790
      %v917 = vpack.c.b16 %v793, %v791
      %v918 = vpack.c.b16 %v796, %v794
      %v919 = vpack.c.b16 %v797, %v795
      %v920 = vpack.c.b16 %v800, %v798
      %v921 = vpack.c.b16 %v801, %v799
      %v922 = vpack.c.b16 %v804, %v802
      %v923 = vpack.c.b16 %v805, %v803
      %v924 = vpack.c.b16 %v808, %v806
      %v925 = vpack.c.b16 %v809, %v807
      %v926 = vpack.c.b16 %v812, %v810
      %v927 = vpack.c.b16 %v813, %v811
      %v928 = vpack.c.b16 %v816, %v814
      %v929 = vpack.c.b16 %v817, %v815
      %v930 = vpack.c.b16 %v820, %v818
      %v931 = vpack.c.b16 %v821, %v819
      %v932 = vpack.c.b16 %v824, %v822
      %v933 = vpack.c.b16 %v825, %v823
      %v934 = vpack.c.b16 %v828, %v826
      %v935 = vpack.c.b16 %v829, %v827
      %v936 = vpack.c.b16 %v832, %v830
      %v937 = vpack.c.b16 %v833, %v831
      %v938 = vpack.c.b16 %v836, %v834
      %v939 = vpack.c.b16 %v837, %v835
      %v940 = vpack.c.b16 %v840, %v838
      %v941 = vpack.c.b16 %v841, %v839
      %v942 = vpack.c.b16 %v844, %v842
      %v943 = vpack.c.b16 %v845, %v843
      %v944 = vpack.c.b16 %v848, %v846
      %v945 = vpack.c.b16 %v849, %v847
      %v946 = vpack.c.b16 %v852, %v850
      %v947 = vpack.c.b16 %v853, %v851
      %v948 = vpack.c.b16 %v856, %v854
      %v949 = vpack.c.b16 %v857, %v855
      %v950 = vpack.c.b16 %v860, %v858
      %v951 = vpack.c.b16 %v861, %v859
      %v952 = vpack.c.b16 %v864, %v862
      %v953 = vpack.c.b16 %v865, %v863
      %v954 = vpack.c.b16 %v868, %v866
      %v955 = vpack.c.b16 %v869, %v867
      %v956 = vpack.c.b16 %v872, %v870
      %v957 = vpack.c.b16 %v873, %v871
      %v958 = vpack.c.b16 %v876, %v874
      %v959 = vpack.c.b16 %v877, %v875
      %v960 = vpack.c.b16 %v880, %v878
      %v961 = vpack.c.b16 %v881, %v879
      %v962 = vpack.c.b16 %v884, %v882
      %v963 = vpack.c.b16 %v885, %v883
      %v964 = vpack.c.b16 %v888, %v886
      %v965 = vpack.c.b16 %v889, %v887
      %v966 = vpack.c.b16 %v892, %v890
      %v967 = vpack.c.b16 %v893, %v891
      %v968 = vpack.c.b16 %v896, %v894
      %v969 = vpack.c.b16 %v897, %v895
      %v970 = vpack.c.b16 %v900, %v898
      %v971 = vpack.c.b16 %v901, %v899
      %v972 = vpack.c.b16 %v904, %v902
      %v973 = vpack.c.b16 %v905, %v903
      %v974 = vpack.c.b16 %v908, %v906
      %v975 = vpack.c.b16 %v909, %v907
      %v976 = vpack.c.b16 %v912, %v910
      %v977 = vpack.c.b16 %v913, %v911
      %1042 = vmatpush.bf16.msra.mxu0 %v928
      %1043 = vmatpush.bf16.msra.mxu0 %v926
      %1044 = vmatpush.bf16.msra.mxu0 %v924
      %1045 = vmatpush.bf16.msra.mxu0 %v922
      %1046 = vmatpush.bf16.msra.mxu0 %v920
      %1047 = vmatpush.bf16.msra.mxu0 %v918
      %1048 = vmatpush.bf16.msra.mxu0 %v916
      %1049 = vmatpush.bf16.msra.mxu0 %v914
      %1050 = vmatmul.bf16.gmra.mxu0 %v648
      %v1051 = vpop.f32.mrf.mxu0
      %v1052 = vadd.f32 %v718, %v1051
      %v1053 = vpop.f32.mrf.mxu0
      %1054 = vdwg.mxu0
      %1055 = vmatpush.bf16.msra.mxu0 %v944
      %1056 = vmatpush.bf16.msra.mxu0 %v942
      %1057 = vmatpush.bf16.msra.mxu0 %v940
      %1058 = vmatpush.bf16.msra.mxu0 %v938
      %1059 = vmatpush.bf16.msra.mxu0 %v936
      %1060 = vmatpush.bf16.msra.mxu0 %v934
      %1061 = vmatpush.bf16.msra.mxu0 %v932
      %1062 = vmatpush.bf16.msra.mxu0 %v930
      %1063 = vmatmul.bf16.gmra.mxu0 %v649
      %v1064 = vpop.f32.mrf.mxu0
      %v1065 = vadd.f32 %v1052, %v1064
      %v1066 = vpop.f32.mrf.mxu0
      %1067 = vdwg.mxu0
      %1068 = vmatpush.bf16.msra.mxu0 %v960
      %1069 = vmatpush.bf16.msra.mxu0 %v958
      %1070 = vmatpush.bf16.msra.mxu0 %v956
      %1071 = vmatpush.bf16.msra.mxu0 %v954
      %1072 = vmatpush.bf16.msra.mxu0 %v952
      %1073 = vmatpush.bf16.msra.mxu0 %v950
      %1074 = vmatpush.bf16.msra.mxu0 %v948
      %1075 = vmatpush.bf16.msra.mxu0 %v946
      %1076 = vmatmul.bf16.gmra.mxu0 %v650
      %v1077 = vpop.f32.mrf.mxu0
      %v1078 = vadd.f32 %v1065, %v1077
      %v1079 = vpop.f32.mrf.mxu0
      %1080 = vdwg.mxu0
      %1081 = vmatpush.bf16.msra.mxu0 %v976
      %1082 = vmatpush.bf16.msra.mxu0 %v974
      %1083 = vmatpush.bf16.msra.mxu0 %v972
      %1084 = vmatpush.bf16.msra.mxu0 %v970
      %1085 = vmatpush.bf16.msra.mxu0 %v968
      %1086 = vmatpush.bf16.msra.mxu0 %v966
      %1087 = vmatpush.bf16.msra.mxu0 %v964
      %1088 = vmatpush.bf16.msra.mxu0 %v962
      %1089 = vmatmul.bf16.gmra.mxu0 %v651
      %v1090 = vpop.f32.mrf.mxu0
      %v1091 = vadd.f32 %v1078, %v1090
      %v1092 = vpop.f32.mrf.mxu0
      %1093 = vdwg.mxu0
      %1094 = vmatpush.bf16.msra.mxu0 %v929
      %1095 = vmatpush.bf16.msra.mxu0 %v927
      %1096 = vmatpush.bf16.msra.mxu0 %v925
      %1097 = vmatpush.bf16.msra.mxu0 %v923
      %1098 = vmatpush.bf16.msra.mxu0 %v921
      %1099 = vmatpush.bf16.msra.mxu0 %v919
      %1100 = vmatpush.bf16.msra.mxu0 %v917
      %1101 = vmatpush.bf16.msra.mxu0 %v915
      %1102 = vmatmul.bf16.gmra.mxu0 %v648
      %v1103 = vpop.f32.mrf.mxu0
      %v1104 = vadd.f32 %v719, %v1103
      %v1105 = vpop.f32.mrf.mxu0
      %1106 = vdwg.mxu0
      %1107 = vmatpush.bf16.msra.mxu0 %v945
      %1108 = vmatpush.bf16.msra.mxu0 %v943
      %1109 = vmatpush.bf16.msra.mxu0 %v941
      %1110 = vmatpush.bf16.msra.mxu0 %v939
      %1111 = vmatpush.bf16.msra.mxu0 %v937
      %1112 = vmatpush.bf16.msra.mxu0 %v935
      %1113 = vmatpush.bf16.msra.mxu0 %v933
      %1114 = vmatpush.bf16.msra.mxu0 %v931
      %1115 = vmatmul.bf16.gmra.mxu0 %v649
      %v1116 = vpop.f32.mrf.mxu0
      %v1117 = vadd.f32 %v1104, %v1116
      %v1118 = vpop.f32.mrf.mxu0
      %1119 = vdwg.mxu0
      %1120 = vmatpush.bf16.msra.mxu0 %v961
      %1121 = vmatpush.bf16.msra.mxu0 %v959
      %1122 = vmatpush.bf16.msra.mxu0 %v957
      %1123 = vmatpush.bf16.msra.mxu0 %v955
      %1124 = vmatpush.bf16.msra.mxu0 %v953
      %1125 = vmatpush.bf16.msra.mxu0 %v951
      %1126 = vmatpush.bf16.msra.mxu0 %v949
      %1127 = vmatpush.bf16.msra.mxu0 %v947
      %1128 = vmatmul.bf16.gmra.mxu0 %v650
      %v1129 = vpop.f32.mrf.mxu0
      %v1130 = vadd.f32 %v1117, %v1129
      %v1131 = vpop.f32.mrf.mxu0
      %1132 = vdwg.mxu0
      %1133 = vmatpush.bf16.msra.mxu0 %v977
      %1134 = vmatpush.bf16.msra.mxu0 %v975
      %1135 = vmatpush.bf16.msra.mxu0 %v973
      %1136 = vmatpush.bf16.msra.mxu0 %v971
      %1137 = vmatpush.bf16.msra.mxu0 %v969
      %1138 = vmatpush.bf16.msra.mxu0 %v967
      %1139 = vmatpush.bf16.msra.mxu0 %v965
      %1140 = vmatpush.bf16.msra.mxu0 %v963
      %1141 = vmatmul.bf16.gmra.mxu0 %v651
      %v1142 = vpop.f32.mrf.mxu0
      %v1143 = vadd.f32 %v1130, %v1142
      %v1144 = vpop.f32.mrf.mxu0
      %1145 = vdwg.mxu0
      %vm1146 = vcmp.gt.f32.partialorder %v1091, 0.0
      %vm1147 = vcmp.gt.f32.partialorder %v1143, 0.0
      %v1148 = vmul.f32 %v1091, 0.2
      %v1149 = vmul.f32 %v1143, 0.2
      %v1150 = vsel %vm1146, %v1091, %v1148
      %v1151 = vsel %vm1147, %v1143, %v1149
      %v1152 = vpack.c.bf16 %v1150, %v1150
      %v1153 = vpack.c.bf16 %v1151, %v1151
      %v1154 = vld [vmem:[#allocation11] sm:$0xf]
      %v1155 = vld [vmem:[#allocation11 + $0x4] sm:$0xf]
      %v1156 = vld [vmem:[#allocation11 + $0x8] sm:$0xf]
      %v1157 = vld [vmem:[#allocation11 + $0xc] sm:$0xf]
      %v1158 = vld [vmem:[#allocation11 + $0x10] sm:$0xf]
      %v1159 = vld [vmem:[#allocation11 + $0x14] sm:$0xf]
      %v1160 = vld [vmem:[#allocation11 + $0x18] sm:$0xf]
      %v1161 = vld [vmem:[#allocation11 + $0x1c] sm:$0xf]
      %v1162 = vld [vmem:[#allocation11 + $0x20] sm:$0xf]
      %v1163 = vld [vmem:[#allocation11 + $0x24] sm:$0xf]
      %v1164 = vld [vmem:[#allocation11 + $0x28] sm:$0xf]
      %v1165 = vld [vmem:[#allocation11 + $0x2c] sm:$0xf]
      %v1166 = vld [vmem:[#allocation11 + $0x30] sm:$0xf]
      %v1167 = vld [vmem:[#allocation11 + $0x34] sm:$0xf]
      %v1168 = vld [vmem:[#allocation11 + $0x38] sm:$0xf]
      %v1169 = vld [vmem:[#allocation11 + $0x3c] sm:$0xf]
      %v1170 = vld [vmem:[#allocation11 + $0x40] sm:$0xf]
      %v1171 = vld [vmem:[#allocation11 + $0x44] sm:$0xf]
      %v1172 = vld [vmem:[#allocation11 + $0x48] sm:$0xf]
      %v1173 = vld [vmem:[#allocation11 + $0x4c] sm:$0xf]
      %v1174 = vld [vmem:[#allocation11 + $0x50] sm:$0xf]
      %v1175 = vld [vmem:[#allocation11 + $0x54] sm:$0xf]
      %v1176 = vld [vmem:[#allocation11 + $0x58] sm:$0xf]
      %v1177 = vld [vmem:[#allocation11 + $0x5c] sm:$0xf]
      %v1178 = vld [vmem:[#allocation11 + $0x60] sm:$0xf]
      %v1179 = vld [vmem:[#allocation11 + $0x64] sm:$0xf]
      %v1180 = vld [vmem:[#allocation11 + $0x68] sm:$0xf]
      %v1181 = vld [vmem:[#allocation11 + $0x6c] sm:$0xf]
      %v1182 = vld [vmem:[#allocation11 + $0x70] sm:$0xf]
      %v1183 = vld [vmem:[#allocation11 + $0x74] sm:$0xf]
      %v1184 = vld [vmem:[#allocation11 + $0x78] sm:$0xf]
      %v1185 = vld [vmem:[#allocation11 + $0x7c] sm:$0xf]
      %v1218 = vunpack.c.l.b16 %v1154
      %v1219 = vunpack.c.l.b16 %v1155
      %v1220 = vunpack.c.l.b16 %v1156
      %v1221 = vunpack.c.l.b16 %v1157
      %v1222 = vunpack.c.l.b16 %v1158
      %v1223 = vunpack.c.l.b16 %v1159
      %v1224 = vunpack.c.l.b16 %v1160
      %v1225 = vunpack.c.l.b16 %v1161
      %v1226 = vunpack.c.l.b16 %v1162
      %v1227 = vunpack.c.l.b16 %v1163
      %v1228 = vunpack.c.l.b16 %v1164
      %v1229 = vunpack.c.l.b16 %v1165
      %v1230 = vunpack.c.l.b16 %v1166
      %v1231 = vunpack.c.l.b16 %v1167
      %v1232 = vunpack.c.l.b16 %v1168
      %v1233 = vunpack.c.l.b16 %v1169
      %v1234 = vunpack.c.l.b16 %v1170
      %v1235 = vunpack.c.l.b16 %v1171
      %v1236 = vunpack.c.l.b16 %v1172
      %v1237 = vunpack.c.l.b16 %v1173
      %v1238 = vunpack.c.l.b16 %v1174
      %v1239 = vunpack.c.l.b16 %v1175
      %v1240 = vunpack.c.l.b16 %v1176
      %v1241 = vunpack.c.l.b16 %v1177
      %v1242 = vunpack.c.l.b16 %v1178
      %v1243 = vunpack.c.l.b16 %v1179
      %v1244 = vunpack.c.l.b16 %v1180
      %v1245 = vunpack.c.l.b16 %v1181
      %v1246 = vunpack.c.l.b16 %v1182
      %v1247 = vunpack.c.l.b16 %v1183
      %v1248 = vunpack.c.l.b16 %v1184
      %v1249 = vunpack.c.l.b16 %v1185
      %v1250 = vpack.c.b16 %v1219, %v1218
      %v1251 = vpack.c.b16 %v1221, %v1220
      %v1252 = vpack.c.b16 %v1223, %v1222
      %v1253 = vpack.c.b16 %v1225, %v1224
      %v1254 = vpack.c.b16 %v1227, %v1226
      %v1255 = vpack.c.b16 %v1229, %v1228
      %v1256 = vpack.c.b16 %v1231, %v1230
      %v1257 = vpack.c.b16 %v1233, %v1232
      %v1258 = vpack.c.b16 %v1235, %v1234
      %v1259 = vpack.c.b16 %v1237, %v1236
      %v1260 = vpack.c.b16 %v1239, %v1238
      %v1261 = vpack.c.b16 %v1241, %v1240
      %v1262 = vpack.c.b16 %v1243, %v1242
      %v1263 = vpack.c.b16 %v1245, %v1244
      %v1264 = vpack.c.b16 %v1247, %v1246
      %v1265 = vpack.c.b16 %v1249, %v1248
      %1282 = vmatpush.bf16.msra.mxu0 %v1257
      %1283 = vmatpush.bf16.msra.mxu0 %v1256
      %1284 = vmatpush.bf16.msra.mxu0 %v1255
      %1285 = vmatpush.bf16.msra.mxu0 %v1254
      %1286 = vmatpush.bf16.msra.mxu0 %v1253
      %1287 = vmatpush.bf16.msra.mxu0 %v1252
      %1288 = vmatpush.bf16.msra.mxu0 %v1251
      %1289 = vmatpush.bf16.msra.mxu0 %v1250
      %1290 = vmatmul.bf16.gmra.mxu0 %v1152
      %v1291 = vpop.f32.mrf.mxu0
      %v1292 = vadd.f32 0.0, %v1291
      %v1293 = vpop.f32.mrf.mxu0
      %1294 = vdwg.mxu0
      %1295 = vmatpush.bf16.msra.mxu0 %v1265
      %1296 = vmatpush.bf16.msra.mxu0 %v1264
      %1297 = vmatpush.bf16.msra.mxu0 %v1263
      %1298 = vmatpush.bf16.msra.mxu0 %v1262
      %1299 = vmatpush.bf16.msra.mxu0 %v1261
      %1300 = vmatpush.bf16.msra.mxu0 %v1260
      %1301 = vmatpush.bf16.msra.mxu0 %v1259
      %1302 = vmatpush.bf16.msra.mxu0 %v1258
      %1303 = vmatmul.bf16.gmra.mxu0 %v1153
      %v1304 = vpop.f32.mrf.mxu0
      %v1305 = vadd.f32 %v1292, %v1304
      %v1306 = vpop.f32.mrf.mxu0
      %1307 = vdwg.mxu0
      %1308 = vst [vmem:[#allocation12] sm:$0x3] %v1305
    $region53: #{tpu_custom_call.1} parent=1 // pred_fallthru
      _
    // Predicated region
    $region54: #{tpu_custom_call.1} parent=1 // pred_check
      _
    $region55: #{tpu_custom_call.1} parent=1 // pred_check_branch
      %1310 = sbr.rel (0) target = $region57
    $region56: #{tpu_custom_call.1} parent=1 // pred_region
      %1312 = vsyncadd [#allocation5], 0
      %s1314 = sshll.u32 [#allocation12], 4
      %s1315 = int_to_ptr.vmem [resolvable:$true] %s1314
      %s1316 = sshll.u32 %s6, 4
      %s1317 = int_to_ptr.hbm [resolvable:$true] %s1316
      %1319 = dma.vmem_to_hbm [thread:$0]  %s1315, 32, %s1317, [#allocation5]
    $region57: #{tpu_custom_call.1} parent=1 // pred_fallthru
      _
    // Predicated region
    $region58: #{tpu_custom_call.1} parent=1 // pred_check
      _
    $region59: #{tpu_custom_call.1} parent=1 // pred_check_branch
      %1321 = sbr.rel (0) target = $region61
    $region60: #{tpu_custom_call.1} parent=1 // pred_region
      %1323 = dma.done [#allocation5], 32
    $region61: #{tpu_custom_call.1} parent=1 // pred_fallthru
      _
    %1324 = vsyncpa [#allocation4], 1
    %1325 = vsyncpa [#allocation7], 1
    %1326 = vsyncpa [#allocation10], 1
    %1327 = vsyncpa [#allocation5], 1

</llo_original>
